<compile_context>
chip_gen: v7x
topology: tpu7x:2x2x1
jax: 0.10.0
libtpu: 0.0.40
codegen_flags: <defaults>
</compile_context>

<pallas_src>
import math
import functools

import jax
import jax.numpy as jnp
from jax.experimental import pallas as pl
from jax.experimental.pallas import tpu as pltpu


_MASK_VALUE = -0.7 * float(jnp.finfo(jnp.float32).max)


def _pick_tile(dim, preferred):
    """Largest preferred tile that divides dim, else the full dim."""
    for t in preferred:
        if t <= dim and dim % t == 0:
            return t
    return dim


# ------------------------- tiled projection matmul ---------------------------

def _matmul_nt_kernel(x_ref, w_ref, o_ref, acc_ref):
    # x: (tm, tk), w: (tn, tk)  ->  o += x @ w^T  (nn.Linear layout, bias=False)
    @pl.when(pl.program_id(2) == 0)
    def _():
        acc_ref[...] = jnp.zeros_like(acc_ref)

    x = x_ref[...].astype(jnp.bfloat16)
    w = w_ref[...].astype(jnp.bfloat16)
    acc_ref[...] += jax.lax.dot_general(
        x, w, (((1,), (1,)), ((), ())), preferred_element_type=jnp.float32)

    @pl.when(pl.program_id(2) == pl.num_programs(2) - 1)
    def _():
        o_ref[...] = acc_ref[...].astype(o_ref.dtype)


def matmul_nt(x, w):
    """x: (M, K), w: (N, K) -> (M, N) = x @ w^T, K-tiled with f32 accumulator."""
    M, K = x.shape
    N, K2 = w.shape
    assert K == K2
    tm = _pick_tile(M, (256, 128, 64, 32, 16, 8))
    tn = _pick_tile(N, (512, 256, 128))
    tk = _pick_tile(K, (512, 256, 128))
    grid = (M // tm, N // tn, K // tk)
    return pl.pallas_call(
        _matmul_nt_kernel,
        out_shape=jax.ShapeDtypeStruct((M, N), x.dtype),
        grid=grid,
        in_specs=[
            pl.BlockSpec((tm, tk), lambda i, j, k: (i, k)),
            pl.BlockSpec((tn, tk), lambda i, j, k: (j, k)),
        ],
        out_specs=pl.BlockSpec((tm, tn), lambda i, j, k: (i, j)),
        scratch_shapes=[pltpu.VMEM((tm, tn), jnp.float32)],
        compiler_params=pltpu.CompilerParams(
            dimension_semantics=("parallel", "parallel", "arbitrary")),
        cost_estimate=pl.CostEstimate(
            flops=2 * M * N * K,
            transcendentals=0,
            bytes_accessed=M * K * x.dtype.itemsize
            + N * K * w.dtype.itemsize
            + M * N * x.dtype.itemsize),
    )(x, w)


# --------------------------- flash attention core -----------------------------

def _flash_kernel(q_ref, k_ref, v_ref, o_ref, m_ref, l_ref, acc_ref, *, scale, causal):
    # Blocks: q (1,1,tq,D), k/v (1,1,tkv,D), o (1,1,tq,D)
    tq = q_ref.shape[2]
    tkv = k_ref.shape[2]
    qi = pl.program_id(2)
    ki = pl.program_id(3)
    q_start = qi * tq
    k_start = ki * tkv

    @pl.when(ki == 0)
    def _():
        m_ref[...] = jnp.full(m_ref.shape, -jnp.inf, jnp.float32)
        l_ref[...] = jnp.zeros(l_ref.shape, jnp.float32)
        acc_ref[...] = jnp.zeros(acc_ref.shape, jnp.float32)

    def _compute():
        # Fold 1/sqrt(D) into q (touches D cols/row instead of the kv_len score row).
        q = (q_ref[0, 0] * scale).astype(jnp.bfloat16)      # (tq, D)
        k = k_ref[0, 0].astype(jnp.bfloat16)                # (tkv, D)
        v = v_ref[0, 0].astype(jnp.bfloat16)                # (tkv, D)

        s = jax.lax.dot_general(                            # q @ k^T, f32 acc
            q, k, (((1,), (1,)), ((), ())), preferred_element_type=jnp.float32)

        if causal:
            row = q_start + jax.lax.broadcasted_iota(jnp.int32, (tq, tkv), 0)
            col = k_start + jax.lax.broadcasted_iota(jnp.int32, (tq, tkv), 1)
            s = jnp.where(row >= col, s, _MASK_VALUE)

        m_prev = m_ref[...]                                 # (tq, 1)
        m_new = jnp.maximum(m_prev, jnp.max(s, axis=-1, keepdims=True))
        alpha = jnp.exp(m_prev - m_new)
        p = jnp.exp(s - m_new)                              # (tq, tkv) f32
        l_ref[...] = alpha * l_ref[...] + jnp.sum(p, axis=-1, keepdims=True)
        acc_ref[...] = alpha * acc_ref[...] + jnp.dot(
            p.astype(jnp.bfloat16), v, preferred_element_type=jnp.float32)
        m_ref[...] = m_new

    if causal:
        # Skip kv tiles that lie entirely above the causal diagonal.
        pl.when(k_start <= q_start + tq - 1)(_compute)
    else:
        _compute()

    @pl.when(ki == pl.num_programs(3) - 1)
    def _():
        inv_l = pl.reciprocal(l_ref[...], approx=True)
        o_ref[0, 0] = (acc_ref[...] * inv_l).astype(o_ref.dtype)


def flash_attention(q, k, v, *, scale, causal=True):
    """q: (B, H, S, D); k, v: (B, Hkv, S, D). Returns (B, H, S, D)."""
    B, H, S, D = q.shape
    Hkv = k.shape[1]
    assert H % Hkv == 0
    group = H // Hkv
    tq = _pick_tile(S, (256, 128, 64, 32, 16, 8))
    tkv = _pick_tile(S, (512, 256, 128, 64, 32, 16, 8))
    grid = (B, H, S // tq, S // tkv)
    kernel = functools.partial(_flash_kernel, scale=scale, causal=causal)
    return pl.pallas_call(
        kernel,
        out_shape=jax.ShapeDtypeStruct((B, H, S, D), q.dtype),
        grid=grid,
        in_specs=[
            pl.BlockSpec((1, 1, tq, D), lambda b, h, qi, ki: (b, h, qi, 0)),
            pl.BlockSpec((1, 1, tkv, D), lambda b, h, qi, ki: (b, h // group, ki, 0)),
            pl.BlockSpec((1, 1, tkv, D), lambda b, h, qi, ki: (b, h // group, ki, 0)),
        ],
        out_specs=pl.BlockSpec((1, 1, tq, D), lambda b, h, qi, ki: (b, h, qi, 0)),
        scratch_shapes=[
            pltpu.VMEM((tq, 1), jnp.float32),   # running max
            pltpu.VMEM((tq, 1), jnp.float32),   # running sum
            pltpu.VMEM((tq, D), jnp.float32),   # output accumulator
        ],
        compiler_params=pltpu.CompilerParams(
            dimension_semantics=("parallel", "parallel", "parallel", "arbitrary")),
        cost_estimate=pl.CostEstimate(
            flops=4 * B * H * S * S * D,
            transcendentals=B * H * S * S,
            bytes_accessed=(q.size + k.size + v.size + q.size) * q.dtype.itemsize),
    )(q, k, v)


# ------------------------------- JAX glue ------------------------------------

def rotate_half(x):
    x1, x2 = jnp.split(x, 2, axis=-1)
    return jnp.concatenate([-x2, x1], axis=-1)


def rotary_cos_sin(position_ids, head_dim, base=10000.0):
    # position_ids: (B, S) int32 -> cos, sin: (B, 1, S, head_dim)
    inv_freq = 1.0 / (base ** (jnp.arange(0, head_dim, 2, dtype=jnp.float32) / head_dim))
    freqs = position_ids.astype(jnp.float32)[..., None] * inv_freq[None, None, :]
    emb = jnp.concatenate([freqs, freqs], axis=-1)
    return jnp.cos(emb)[:, None, :, :], jnp.sin(emb)[:, None, :, :]


class LlamaAttentionGEARPallas:
    """Prefill forward of LlamaAttention_GEAR (past_key_value=None, causal mask)."""

    def __init__(self, hidden_size, num_heads, num_kv_heads, rope_theta=10000.0,
                 residual_length=4, key=None):
        assert hidden_size % num_heads == 0
        assert num_heads % num_kv_heads == 0
        self.hidden_size = hidden_size
        self.num_heads = num_heads
        self.num_key_value_heads = num_kv_heads
        self.head_dim = hidden_size // num_heads
        self.rope_theta = rope_theta
        self.residual_length = residual_length

        k0, k1, k2, k3 = jax.random.split(key, 4)
        scale = 1.0 / math.sqrt(hidden_size)
        # nn.Linear weight layout: (out_features, in_features); bias=False
        q_w = jax.random.normal(k0, (num_heads * self.head_dim, hidden_size), jnp.float32) * scale
        k_w = jax.random.normal(k1, (num_kv_heads * self.head_dim, hidden_size), jnp.float32) * scale
        v_w = jax.random.normal(k2, (num_kv_heads * self.head_dim, hidden_size), jnp.float32) * scale
        # Fused QKV weight: one x @ W^T instead of three (single activation DMA).
        self.qkv_w = jnp.concatenate([q_w, k_w, v_w], axis=0)
        self.o_w = jax.random.normal(k3, (hidden_size, num_heads * self.head_dim), jnp.float32) * scale

    def __call__(self, hidden_states, position_ids=None, causal=True):
        B, S, _ = hidden_states.shape
        H, D = self.num_heads, self.head_dim
        Hkv = self.num_key_value_heads

        if position_ids is None:
            position_ids = jnp.broadcast_to(jnp.arange(S, dtype=jnp.int32)[None, :], (B, S))

        # Fused QKV projection (tiled Pallas matmul).
        x2d = hidden_states.reshape(B * S, self.hidden_size)
        qkv = matmul_nt(x2d, self.qkv_w)                      # (B*S, (H+2*Hkv)*D)
        q = qkv[:, :H * D].reshape(B, S, H, D).transpose(0, 2, 1, 3)
        k = qkv[:, H * D:(H + Hkv) * D].reshape(B, S, Hkv, D).transpose(0, 2, 1, 3)
        v = qkv[:, (H + Hkv) * D:].reshape(B, S, Hkv, D).transpose(0, 2, 1, 3)

        # RoPE (elementwise, XLA-fused).
        cos, sin = rotary_cos_sin(position_ids, D, base=self.rope_theta)
        q = q * cos + rotate_half(q) * sin
        k = k * cos + rotate_half(k) * sin

        # Flash attention with in-kernel causal masking.
        attn_out = flash_attention(q, k, v, scale=1.0 / math.sqrt(D), causal=causal)

        attn_out = attn_out.transpose(0, 2, 1, 3).reshape(B * S, H * D)
        out = matmul_nt(attn_out, self.o_w).reshape(B, S, self.hidden_size)
        # attn_weights returned as None; GEAR cache path not reproduced (see TODOs above).
        return out, None, None


# --------------------------- pure-JAX reference --------------------------------

def reference_forward(attn, hidden_states, position_ids=None):
    B, S, _ = hidden_states.shape
    H, D, Hkv = attn.num_heads, attn.head_dim, attn.num_key_value_heads
    if position_ids is None:
        position_ids = jnp.broadcast_to(jnp.arange(S, dtype=jnp.int32)[None, :], (B, S))
    x2d = hidden_states.reshape(B * S, attn.hidden_size)
    qkv = x2d @ attn.qkv_w.T
    q = qkv[:, :H * D].reshape(B, S, H, D).transpose(0, 2, 1, 3)
    k = qkv[:, H * D:(H + Hkv) * D].reshape(B, S, Hkv, D).transpose(0, 2, 1, 3)
    v = qkv[:, (H + Hkv) * D:].reshape(B, S, Hkv, D).transpose(0, 2, 1, 3)
    cos, sin = rotary_cos_sin(position_ids, D, base=attn.rope_theta)
    q = q * cos + rotate_half(q) * sin
    k = k * cos + rotate_half(k) * sin
    neg = jnp.finfo(jnp.float32).min
    mask = jnp.where(jnp.tril(jnp.ones((S, S), bool)), 0.0, neg)
    s = jnp.einsum("bhqd,bhkd->bhqk", q, k) / math.sqrt(D) + mask
    s = jnp.maximum(s, neg)
    p = jax.nn.softmax(s.astype(jnp.float32), axis=-1)
    o = jnp.einsum("bhqk,bhkd->bhqd", p, v)
    o = o.transpose(0, 2, 1, 3).reshape(B * S, H * D)
    return (o @ attn.o_w.T).reshape(B, S, attn.hidden_size)


# --------------------------------- main ----------------------------------------

if __name__ == "__main__":
    key = jax.random.PRNGKey(0)
    k_params, k_x = jax.random.split(key)

    # small config: hidden=32, heads=2 (head_dim=16), kv_heads=2, batch=2, seq=8
    B, S, HID, NH = 2, 8, 32, 2
    attn = LlamaAttentionGEARPallas(hidden_size=HID, num_heads=NH, num_kv_heads=NH,
                                    residual_length=4, key=k_params)

    hidden_states = jax.random.normal(k_x, (B, S, HID), jnp.float32)

    out, _, _ = attn(hidden_states)                    # causal mask applied in-kernel
    out = jax.block_until_ready(out)

    assert out.shape == (B, S, HID)
    assert bool(jnp.all(jnp.isfinite(out)))

    ref = reference_forward(attn, hidden_states)
    assert bool(jnp.allclose(out, ref, atol=1e-1, rtol=1e-1)), \
        f"max abs diff {float(jnp.max(jnp.abs(out - ref)))}"

    print("KERNEL_OK")
</pallas_src>

<mosaic_0001>
module attributes {stable_mosaic.version = 11 : i64} {
  func.func @_matmul_nt_kernel(%arg0: i32, %arg1: i32, %arg2: i32, %arg3: memref<16x32xf32, #tpu.memory_space<vmem>>, %arg4: memref<96x32xf32, #tpu.memory_space<vmem>>, %arg5: memref<16x96xf32, #tpu.memory_space<vmem>>, %arg6: memref<16x96xf32, #tpu.memory_space<vmem>>) attributes {dimension_semantics = [#tpu.dimension_semantics<parallel>, #tpu.dimension_semantics<parallel>, #tpu.dimension_semantics<arbitrary>], iteration_bounds = array<i64: 1, 1, 1>, scalar_prefetch = 0 : i64, scratch_operands = 1 : i64, tpu.core_type = #tpu.core_type<tc>, window_params = [{transform_indices = @transform_0, window_bounds = array<i64: 16, 32>}, {transform_indices = @transform_1, window_bounds = array<i64: 96, 32>}, {transform_indices = @transform_2, window_bounds = array<i64: 16, 96>}]} {
    %c0_i32 = arith.constant 0 : i32
    %0 = arith.cmpi eq, %arg2, %c0_i32 : i32
    %1 = arith.extui %0 : i1 to i32
    %c0_i32_0 = arith.constant 0 : i32
    %2 = arith.cmpi ne, %1, %c0_i32_0 : i32
    scf.if %2 {
      %cst_10 = arith.constant 0.000000e+00 : f32
      %14 = vector.broadcast %cst_10 : f32 to vector<16x96xf32>
      %c0_11 = arith.constant 0 : index
      %c0_12 = arith.constant 0 : index
      %15 = vector.load %arg6[%c0_11, %c0_12] : memref<16x96xf32, #tpu.memory_space<vmem>>, vector<16x96xf32>
      tpu.vector_store %arg6[%c0_11, %c0_12], %14 {strides = array<i32>} : memref<16x96xf32, #tpu.memory_space<vmem>>, vector<16x96xf32>,
    } else {
    }
    %c0 = arith.constant 0 : index
    %c0_1 = arith.constant 0 : index
    %3 = vector.load %arg3[%c0, %c0_1] : memref<16x32xf32, #tpu.memory_space<vmem>>, vector<16x32xf32>
    %4 = arith.truncf %3 : vector<16x32xf32> to vector<16x32xbf16>
    %c0_2 = arith.constant 0 : index
    %c0_3 = arith.constant 0 : index
    %5 = vector.load %arg4[%c0_2, %c0_3] : memref<96x32xf32, #tpu.memory_space<vmem>>, vector<96x32xf32>
    %6 = arith.truncf %5 : vector<96x32xf32> to vector<96x32xbf16>
    %c0_4 = arith.constant 0 : index
    %c0_5 = arith.constant 0 : index
    %7 = vector.load %arg6[%c0_4, %c0_5] : memref<16x96xf32, #tpu.memory_space<vmem>>, vector<16x96xf32>
    %cst = arith.constant dense<0.000000e+00> : vector<16x96xf32>
    %8 = tpu.matmul %4, %6, %cst {dimension_numbers = #tpu.dot_dimension_numbers<[1], [1], [0], [0], [0, 0, 1, 0], [], []>} : vector<16x32xbf16>, vector<96x32xbf16>, vector<16x96xf32> -> vector<16x96xf32>
    %9 = arith.addf %7, %8 : vector<16x96xf32>
    %c0_6 = arith.constant 0 : index
    %c0_7 = arith.constant 0 : index
    %10 = vector.load %arg6[%c0_6, %c0_7] : memref<16x96xf32, #tpu.memory_space<vmem>>, vector<16x96xf32>
    tpu.vector_store %arg6[%c0_6, %c0_7], %9 {strides = array<i32>} : memref<16x96xf32, #tpu.memory_space<vmem>>, vector<16x96xf32>,
    %c0_i32_8 = arith.constant 0 : i32
    %11 = arith.cmpi eq, %arg2, %c0_i32_8 : i32
    %12 = arith.extui %11 : i1 to i32
    %c0_i32_9 = arith.constant 0 : i32
    %13 = arith.cmpi ne, %12, %c0_i32_9 : i32
    scf.if %13 {
      %c0_10 = arith.constant 0 : index
      %c0_11 = arith.constant 0 : index
      %14 = vector.load %arg6[%c0_10, %c0_11] : memref<16x96xf32, #tpu.memory_space<vmem>>, vector<16x96xf32>
      %c0_12 = arith.constant 0 : index
      %c0_13 = arith.constant 0 : index
      %15 = vector.load %arg5[%c0_12, %c0_13] : memref<16x96xf32, #tpu.memory_space<vmem>>, vector<16x96xf32>
      tpu.vector_store %arg5[%c0_12, %c0_13], %14 {strides = array<i32>} : memref<16x96xf32, #tpu.memory_space<vmem>>, vector<16x96xf32>,
    } else {
    }
    return
  }
  func.func @transform_0(%arg0: i32, %arg1: i32, %arg2: i32) -> (i32, i32) {
    %c0_i32 = arith.constant 0 : i32
    return %arg0, %arg2 : i32, i32
  }
  func.func @transform_1(%arg0: i32, %arg1: i32, %arg2: i32) -> (i32, i32) {
    %c0_i32 = arith.constant 0 : i32
    return %arg1, %arg2 : i32, i32
  }
  func.func @transform_2(%arg0: i32, %arg1: i32, %arg2: i32) -> (i32, i32) {
    %c0_i32 = arith.constant 0 : i32
    return %arg0, %arg1 : i32, i32
  }
}

</mosaic_0001>

<llo_original>
// kernel: tpu_custom_call.1
$region0: #{tpu_custom_call.1}
  #allocation0 [shape = 'u32[]', space=smem, size = 0x4, offset = 0x4, fixed_abs, tag = 'smem constant byte address 0x4 - core index']
  #allocation1 [shape = 'u32[144,128]{1,0:T(1,128)}', space=vmem, size = 0x12000, scoped, tag = 'internal scratch']
  #allocation2 [shape = 'f32[16,96]{1,0:T(8,128)}', space=vmem, size = 0x2000, scoped, tag = 'scratch operand']
  %s0 = inlined_call_operand.vmem [shape: f32[16,32], index: 0, kind: input, shape index: {}]
  %s1 = inlined_call_operand.vmem [shape: f32[96,32], index: 1, kind: input, shape index: {}]
  %s2 = inlined_call_operand.hbm [shape: f32[16,96], index: 2, kind: output, shape index: {}]
  %s3 = sld [smem:[#allocation0]]
  $region26: #{tpu_custom_call.1} parent=0
    _
  %s5 = ssub.s32 1, %s3
  %s6 = scalar_select 0, %s5, %s3
  $region1: #{tpu_custom_call.1} parent=0
    #allocation3 [shape = 'u8[8192]{0}', space=vmem, size = 0x2000, scoped, tag = 'output window, operand 0, single buffered']
    #allocation4 [shape = 's32[1]{0}', space=sflag, size = 0x4, scoped, tag = 'scoped memory for tpu_custom_call.1']
    %7 = vsyncpa [#allocation4], 0
    // Predicated region
    $region2: #{tpu_custom_call.1} parent=1 // pred_check
      _
    $region3: #{tpu_custom_call.1} parent=1 // pred_check_branch
      %9 = sbr.rel (0) target = $region5
    $region4: #{tpu_custom_call.1} parent=1 // pred_region
      _
    $region5: #{tpu_custom_call.1} parent=1 // pred_fallthru
      _
    // Predicated region
    $region6: #{tpu_custom_call.1} parent=1 // pred_check
      _
    $region7: #{tpu_custom_call.1} parent=1 // pred_check_branch
      %11 = sbr.rel (0) target = $region9
    $region8: #{tpu_custom_call.1} parent=1 // pred_region
      _
    $region9: #{tpu_custom_call.1} parent=1 // pred_fallthru
      _
    %p13 = scmp.eq.s32.totalorder 0, 0
    // Predicated region
    $region10: #{tpu_custom_call.1} parent=1 // pred_check
      %p14 = pneg %p13
    $region11: #{tpu_custom_call.1} parent=1 // pred_check_branch
      %16 = sbr.rel (%p14) target = $region13
    $region12: #{tpu_custom_call.1} parent=1 // pred_region
      %vm17 = vcmask 785408
      %18 = vst.msk [vmem:[#allocation2] sm:$0xff] %vm17, 0.0
      %19 = vst.msk [vmem:[#allocation2 + $0x8] sm:$0xff] %vm17, 0.0
    $region13: #{tpu_custom_call.1} parent=1 // pred_fallthru
      _
    %v20 = vld [vmem:[%s0] sm:$0xff]
    %v21 = vld [vmem:[%s0 + $0x8] sm:$0xff]
    %v22 = vpack.c.bf16 %v21, %v20
    %v23 = vld [vmem:[%s1] sm:$0xff]
    %v24 = vld [vmem:[%s1 + $0x8] sm:$0xff]
    %v25 = vld [vmem:[%s1 + $0x10] sm:$0xff]
    %v26 = vld [vmem:[%s1 + $0x18] sm:$0xff]
    %v27 = vld [vmem:[%s1 + $0x20] sm:$0xff]
    %v28 = vld [vmem:[%s1 + $0x28] sm:$0xff]
    %v29 = vld [vmem:[%s1 + $0x30] sm:$0xff]
    %v30 = vld [vmem:[%s1 + $0x38] sm:$0xff]
    %v31 = vld [vmem:[%s1 + $0x40] sm:$0xff]
    %v32 = vld [vmem:[%s1 + $0x48] sm:$0xff]
    %v33 = vld [vmem:[%s1 + $0x50] sm:$0xff]
    %v34 = vld [vmem:[%s1 + $0x58] sm:$0xff]
    %v35 = vpack.c.bf16 %v24, %v23
    %v36 = vpack.c.bf16 %v26, %v25
    %v37 = vpack.c.bf16 %v28, %v27
    %v38 = vpack.c.bf16 %v30, %v29
    %v39 = vpack.c.bf16 %v32, %v31
    %v40 = vpack.c.bf16 %v34, %v33
    %v41 = vld [vmem:[#allocation2] sm:$0xff]
    %v42 = vld [vmem:[#allocation2 + $0x8] sm:$0xff]
    %vm43 = vcmask 261120
    %v45 = vsel %vm43, %v22, 0
    %v48 = vsel %vm43, %v35, 0
    %v51 = vsel %vm43, %v36, 0
    %v54 = vsel %vm43, %v37, 0
    %v57 = vsel %vm43, %v38, 0
    %v60 = vsel %vm43, %v39, 0
    %v63 = vsel %vm43, %v40, 0
    %65 = vmatprep.subr.bf16.mxu0 0
    %66 = vmatpush1.bf16.xpose.msra.mxu0 %v48
    %67 = vmatprep.subr.bf16.mxu0 0
    %68 = vmatpush1.bf16.xpose.msra.mxu0 %v51
    %69 = vmatprep.subr.bf16.mxu0 0
    %70 = vmatpush1.bf16.xpose.msra.mxu0 %v54
    %71 = vmatprep.subr.bf16.mxu0 0
    %72 = vmatpush1.bf16.xpose.msra.mxu0 %v57
    %73 = vmatprep.subr.bf16.mxu0 0
    %74 = vmatpush1.bf16.xpose.msra.mxu0 %v60
    %75 = vmatprep.subr.bf16.mxu0 0
    %76 = vmatpush1.bf16.xpose.msra.mxu0 %v63
    %77 = vmatprep.subr.bf16.mxu0 0
    %78 = vmatpush1.bf16.xpose.msra.mxu0 0
    %79 = vmatprep.subr.bf16.mxu0 0
    %80 = vmatpush1.bf16.xpose.msra.mxu0 0
    %81 = vmatprep.subr.bf16.mxu0 0
    %82 = vmatpush1.bf16.xpose.msra.mxu0 0
    %83 = vmatprep.subr.bf16.mxu0 0
    %84 = vmatpush1.bf16.xpose.msra.mxu0 0
    %85 = vmatprep.subr.bf16.mxu0 0
    %86 = vmatpush1.bf16.xpose.msra.mxu0 0
    %87 = vmatprep.subr.bf16.mxu0 0
    %88 = vmatpush1.bf16.xpose.msra.mxu0 0
    %89 = vmatprep.subr.bf16.mxu0 0
    %90 = vmatpush1.bf16.xpose.msra.mxu0 0
    %91 = vmatprep.subr.bf16.mxu0 0
    %92 = vmatpush1.bf16.xpose.msra.mxu0 0
    %93 = vmatprep.subr.bf16.mxu0 0
    %94 = vmatpush1.bf16.xpose.msra.mxu0 0
    %95 = vmatprep.subr.bf16.mxu0 0
    %96 = vmatpush1.bf16.xpose.msra.mxu0 0
    %97 = vmatprep.mubr.bf16.mxu0 0
    %98 = vmatmul.mubr.bf16.gmra.mrb[0].mxu0 %v45
    %v99 = vpop.f32.mrb[0].mxu0
    %v100 = vadd.f32 0.0, %v99
    %v101 = vpop.f32.mrb[0].mxu0
    %v102 = vpop.f32.mrb[0].mxu0
    %v103 = vadd.f32 0.0, %v102
    %v104 = vpop.f32.mrb[0].mxu0
    %105 = vdwg.mxu0
    %v106 = vadd.f32 %v41, %v100
    %v107 = vadd.f32 %v42, %v103
    %vm108 = vcmask 785408
    %109 = vst.msk [vmem:[#allocation2] sm:$0xff] %vm108, %v106
    %110 = vst.msk [vmem:[#allocation2 + $0x8] sm:$0xff] %vm108, %v107
    // Predicated region
    $region14: #{tpu_custom_call.1} parent=1 // pred_check
      %p111 = pneg %p13
    $region15: #{tpu_custom_call.1} parent=1 // pred_check_branch
      %113 = sbr.rel (%p111) target = $region17
    $region16: #{tpu_custom_call.1} parent=1 // pred_region
      %v114 = vld [vmem:[#allocation2] sm:$0xff]
      %v115 = vld [vmem:[#allocation2 + $0x8] sm:$0xff]
      %116 = vst.msk [vmem:[#allocation3] sm:$0xff] %vm108, %v114
      %117 = vst.msk [vmem:[#allocation3 + $0x8] sm:$0xff] %vm108, %v115
    $region17: #{tpu_custom_call.1} parent=1 // pred_fallthru
      _
    // Predicated region
    $region18: #{tpu_custom_call.1} parent=1 // pred_check
      _
    $region19: #{tpu_custom_call.1} parent=1 // pred_check_branch
      %119 = sbr.rel (0) target = $region21
    $region20: #{tpu_custom_call.1} parent=1 // pred_region
      %s121 = ssub.s32 256, 256
      %122 = vsyncadd [#allocation4], %s121
      %s123 = sshll.u32 [#allocation3], 4
      %s124 = int_to_ptr.vmem [resolvable:$true] %s123
      %129 = dma.vmem_to_hbm [thread:$0]  %s124, 256, %s2, [#allocation4], 128, 128, 8
    $region21: #{tpu_custom_call.1} parent=1 // pred_fallthru
      _
    // Predicated region
    $region22: #{tpu_custom_call.1} parent=1 // pred_check
      _
    $region23: #{tpu_custom_call.1} parent=1 // pred_check_branch
      %131 = sbr.rel (0) target = $region25
    $region24: #{tpu_custom_call.1} parent=1 // pred_region
      %132 = dma.done [#allocation4], 256
    $region25: #{tpu_custom_call.1} parent=1 // pred_fallthru
      _
    %133 = vsyncpa [#allocation4], 1

</llo_original>
